<compile_context>
chip_gen: v7x
topology: tpu7x:2x2x1
jax: 0.10.0
libtpu: 0.0.40
codegen_flags: <defaults>
</compile_context>

<pallas_src>
import functools

import jax
import jax.numpy as jnp
from jax.experimental import pallas as pl
from jax.experimental.pallas import tpu as pltpu


def _round_up(x, m):
    return (x + m - 1) // m * m


def _grt_project_kernel(x_ref, dirs_ref, o_ref):
    """One (tile_m, K) x-block times the resident (K, D_pad) directions block."""
    o_ref[...] = jnp.dot(
        x_ref[...],
        dirs_ref[...],
        preferred_element_type=jnp.float32,
    ).astype(o_ref.dtype)


@functools.partial(jax.jit, static_argnames=("tile_m",))
def _grt_project_pallas(x2d, dirs, tile_m):
    """x2d: [M_pad, K] (M_pad % tile_m == 0), dirs: [K, D_pad] (D_pad % 128 == 0)."""
    M, K = x2d.shape
    _, D = dirs.shape
    grid = (M // tile_m,)

    itemsize = jnp.dtype(x2d.dtype).itemsize
    # Double-buffered x tile + (conservatively double-buffered) dirs + out tile.
    working_set = (2 * tile_m * K + 2 * K * D + 2 * tile_m * D) * itemsize
    vmem_limit = int(min(64 * 1024 * 1024, max(32 * 1024 * 1024, 2 * working_set)))

    return pl.pallas_call(
        _grt_project_kernel,
        out_shape=jax.ShapeDtypeStruct((M, D), x2d.dtype),
        grid_spec=pltpu.PrefetchScalarGridSpec(
            num_scalar_prefetch=0,
            grid=grid,
            in_specs=[
                pl.BlockSpec((tile_m, K), lambda i: (i, 0)),
                pl.BlockSpec((K, D), lambda i: (0, 0)),  # constant index -> resident
            ],
            out_specs=pl.BlockSpec((tile_m, D), lambda i: (i, 0)),
        ),
        compiler_params=pltpu.CompilerParams(
            # Single row-tile axis; "parallel" lets the runtime shard it across
            # the two TensorCores on v7x.
            dimension_semantics=("parallel",),
            vmem_limit_bytes=vmem_limit,
        ),
    )(x2d, dirs)


def grt_project(x2d, theta, *, tile_m=256, use_pallas=None):
    """GRT projection: out = x2d @ (theta / ||theta||_col). x2d: [M, K], theta: [K, D]."""
    M, K = x2d.shape
    Kt, D = theta.shape
    assert K == Kt, (K, Kt)

    # Hoisted column normalization (rsqrt + multiply instead of sqrt + divide).
    # No epsilon, to exactly match the PyTorch reference semantics.
    theta_f32 = theta.astype(jnp.float32)
    inv_norm = jax.lax.rsqrt(jnp.sum(theta_f32 * theta_f32, axis=0, keepdims=True))
    directions = (theta_f32 * inv_norm).astype(x2d.dtype)

    if use_pallas is None:
        # Tiny problems: one grid step of fixed overhead dwarfs the matmul.
        use_pallas = (M * K * D) >= (1 << 18)
    if not use_pallas:
        return jnp.dot(x2d, directions,
                       preferred_element_type=jnp.float32).astype(x2d.dtype)

    # Lane-dense output: pad D up to a multiple of 128 (sliced off afterwards).
    D_pad = _round_up(D, 128)

    # Row tile: big enough to amortize per-step overhead, capped by M and by a
    # v7x-safe VMEM budget (64 MiB per TensorCore).
    itemsize = jnp.dtype(x2d.dtype).itemsize
    tile = min(int(tile_m), _round_up(M, 8))

    def _footprint(tm):
        return (2 * tm * K + 2 * K * D_pad + 2 * tm * D_pad) * itemsize

    while tile > 8 and _footprint(tile) > 40 * 1024 * 1024:
        tile //= 2
    tile = max(8, _round_up(tile, 8))
    # TODO(synk): for very large K a K-reduction grid axis ("arbitrary", last)
    # with a (tile, D_pad) f32 VMEM accumulator would keep the working set
    # small; not needed at these sizes.

    M_pad = _round_up(M, tile)
    x_p = jnp.pad(x2d, ((0, M_pad - M), (0, 0))) if M_pad != M else x2d
    dirs_p = (jnp.pad(directions, ((0, 0), (0, D_pad - D)))
              if D_pad != D else directions)

    out = _grt_project_pallas(x_p, dirs_p, tile)
    return out[:M, :D]


class CircularGRT:
    """JAX mirror of the PyTorch CircularGRT / LinearGRT family."""

    def __init__(self, in_features, directions, key):
        # nn.Parameter(torch.randn(in_features, directions)), requires_grad=False
        self.theta = jax.random.normal(key, (in_features, directions),
                                       dtype=jnp.float32)

    def reset_parameters(self, key):
        self.theta = jax.random.normal(key, self.theta.shape, dtype=jnp.float32)

    def set_theta(self, theta):
        theta = jnp.asarray(theta)
        assert theta.shape == self.theta.shape
        self.theta = theta

    def forward(self, x, projection_dim=-1, use_pallas=None):
        ndim = x.ndim
        moved = projection_dim not in (-1, ndim - 1)
        if moved:
            x = jnp.moveaxis(x, projection_dim, -1)
        lead_shape = x.shape[:-1]
        K = x.shape[-1]
        x2d = x.reshape(-1, K)
        out2d = grt_project(x2d, self.theta, use_pallas=use_pallas)
        out = out2d.reshape(*lead_shape, self.theta.shape[1])
        if moved:
            out = jnp.moveaxis(out, -1, projection_dim)
        return out

    def __call__(self, x, projection_dim=-1, use_pallas=None):
        return self.forward(x, projection_dim, use_pallas)

    def gsw(self, x, y, theta=None, use_pallas=None):
        """Generalized sliced-Wasserstein loss (MSE of dim=-1-sorted projections,
        matching the reference's torch.sort(dim=-1)).

        `theta` may be an array to install via set_theta.
        TODO(synk): the reference's theta='reset' uses torch's implicit global
        RNG; in JAX call reset_parameters(key) explicitly instead.
        """
        assert x.shape == y.shape
        if theta is not None:
            self.set_theta(theta)
        x_slice = self.forward(x, use_pallas=use_pallas)
        y_slice = self.forward(y, use_pallas=use_pallas)
        x_sorted = jnp.sort(x_slice, axis=-1)
        y_sorted = jnp.sort(y_slice, axis=-1)
        return jnp.mean((x_sorted - y_sorted) ** 2)


if __name__ == "__main__":
    key = jax.random.PRNGKey(0)
    k_theta, k_x, k_y = jax.random.split(key, 3)

    batch, seq, in_features, directions = 2, 8, 32, 16
    module = CircularGRT(in_features, directions, k_theta)

    x = jax.random.normal(k_x, (batch, seq, in_features), dtype=jnp.float32)
    y = jax.random.normal(k_y, (batch, seq, in_features), dtype=jnp.float32)

    # Forward through the Pallas kernel (forced, since the demo shape is tiny).
    out = module.forward(x, use_pallas=True)
    out = jax.block_until_ready(out)

    # Sanity check vs. plain-JAX reference.
    dirs = module.theta / jnp.linalg.norm(module.theta, axis=0, keepdims=True)
    ref = x @ dirs
    assert out.shape == (batch, seq, directions)
    assert jnp.allclose(out, ref, atol=1e-5, rtol=1e-5)

    # Auto-dispatch path (tiny problem -> plain dot fallback) must agree too.
    out_auto = jax.block_until_ready(module(x))
    assert jnp.allclose(out_auto, ref, atol=1e-5, rtol=1e-5)

    # Exercise the gsw loss path (sorting is glue; projection is the kernel).
    loss = jax.block_until_ready(module.gsw(x, y, use_pallas=True))
    assert jnp.isfinite(loss)

    print("KERNEL_OK")
</pallas_src>

<mosaic_0001>
module attributes {stable_mosaic.version = 11 : i64} {
  func.func @_grt_project_kernel(%arg0: i32, %arg1: memref<16x32xf32, #tpu.memory_space<vmem>>, %arg2: memref<32x128xf32, #tpu.memory_space<vmem>>, %arg3: memref<16x128xf32, #tpu.memory_space<vmem>>) attributes {dimension_semantics = [#tpu.dimension_semantics<parallel>], iteration_bounds = array<i64: 1>, scalar_prefetch = 0 : i64, scratch_operands = 0 : i64, tpu.core_type = #tpu.core_type<tc>, window_params = [{transform_indices = @transform_0, window_bounds = array<i64: 16, 32>}, {pipeline_mode = #tpu.pipeline_mode<synchronous>, transform_indices = @transform_1, window_bounds = array<i64: 32, 128>}, {transform_indices = @transform_2, window_bounds = array<i64: 16, 128>}]} {
    %c0 = arith.constant 0 : index
    %c0_0 = arith.constant 0 : index
    %0 = vector.load %arg1[%c0, %c0_0] : memref<16x32xf32, #tpu.memory_space<vmem>>, vector<16x32xf32>
    %c0_1 = arith.constant 0 : index
    %c0_2 = arith.constant 0 : index
    %1 = vector.load %arg2[%c0_1, %c0_2] : memref<32x128xf32, #tpu.memory_space<vmem>>, vector<32x128xf32>
    %cst = arith.constant dense<0.000000e+00> : vector<16x128xf32>
    %2 = tpu.matmul %0, %1, %cst {dimension_numbers = #tpu.dot_dimension_numbers<[1], [0], [0], [1], [0, 0, 1, 1], [], []>} : vector<16x32xf32>, vector<32x128xf32>, vector<16x128xf32> -> vector<16x128xf32>
    %c0_3 = arith.constant 0 : index
    %c0_4 = arith.constant 0 : index
    %3 = vector.load %arg3[%c0_3, %c0_4] : memref<16x128xf32, #tpu.memory_space<vmem>>, vector<16x128xf32>
    tpu.vector_store %arg3[%c0_3, %c0_4], %2 {strides = array<i32>} : memref<16x128xf32, #tpu.memory_space<vmem>>, vector<16x128xf32>,
    return
  }
  func.func @transform_0(%arg0: i32) -> (i32, i32) {
    %c0_i32 = arith.constant 0 : i32
    %c0_i32_0 = arith.constant 0 : i32
    return %arg0, %c0_i32 : i32, i32
  }
  func.func @transform_1(%arg0: i32) -> (i32, i32) {
    %c0_i32 = arith.constant 0 : i32
    %c0_i32_0 = arith.constant 0 : i32
    %c0_i32_1 = arith.constant 0 : i32
    return %c0_i32, %c0_i32_0 : i32, i32
  }
  func.func @transform_2(%arg0: i32) -> (i32, i32) {
    %c0_i32 = arith.constant 0 : i32
    %c0_i32_0 = arith.constant 0 : i32
    return %arg0, %c0_i32 : i32, i32
  }
}

</mosaic_0001>

<llo_original>
// kernel: _grt_project_pallas.1
$region0: #{_grt_project_pallas.1}
  #allocation0 [shape = 'u32[]', space=smem, size = 0x4, offset = 0x4, fixed_abs, tag = 'smem constant byte address 0x4 - core index']
  #allocation1 [shape = 'u32[144,128]{1,0:T(1,128)}', space=vmem, size = 0x12000, scoped, tag = 'internal scratch']
  %s0 = inlined_call_operand.hbm [shape: f32[16,32], index: 0, kind: input, shape index: {}]
  %s1 = inlined_call_operand.hbm [shape: f32[32,128], index: 1, kind: input, shape index: {}]
  %s2 = inlined_call_operand.hbm [shape: f32[16,128], index: 2, kind: output, shape index: {}]
  %s3 = sld [smem:[#allocation0]]
  $region26: #{_grt_project_pallas.1} parent=0
    _
  %s5 = ssub.s32 1, %s3
  %s6 = scalar_select 0, %s5, %s3
  $region1: #{_grt_project_pallas.1} parent=0
    #allocation2 [shape = 'u8[8192]{0}', space=vmem, size = 0x2000, scoped, tag = 'input window, operand 0, single buffered']
    #allocation3 [shape = 's32[1]{0}', space=sflag, size = 0x4, scoped, tag = 'scoped memory for _grt_project_pallas.1']
    #allocation4 [shape = 's32[1]{0}', space=sflag, size = 0x4, scoped, tag = 'scoped memory for _grt_project_pallas.1']
    #allocation5 [shape = 'u8[16384]{0}', space=vmem, size = 0x4000, scoped, tag = 'input window, operand 1, single buffered']
    #allocation6 [shape = 's32[1]{0}', space=sflag, size = 0x4, scoped, tag = 'scoped memory for _grt_project_pallas.1']
    #allocation7 [shape = 'u8[8192]{0}', space=vmem, size = 0x2000, scoped, tag = 'output window, operand 0, single buffered']
    %7 = vsyncpa [#allocation3], 0
    %8 = vsyncpa [#allocation6], 0
    %9 = vsyncpa [#allocation4], 0
    // Predicated region
    $region2: #{_grt_project_pallas.1} parent=1 // pred_check
      _
    $region3: #{_grt_project_pallas.1} parent=1 // pred_check_branch
      %11 = sbr.rel (0) target = $region5
    $region4: #{_grt_project_pallas.1} parent=1 // pred_region
      %s13 = ssub.s32 256, 256
      %14 = vsyncadd [#allocation3], %s13
      %s15 = sshll.u32 [#allocation2], 4
      %s16 = int_to_ptr.vmem [resolvable:$true] %s15
      %21 = dma.hbm_to_vmem [thread:$0]  %s0, 256, %s16, [#allocation3], 128, 128, 8
    $region5: #{_grt_project_pallas.1} parent=1 // pred_fallthru
      _
    // Predicated region
    $region6: #{_grt_project_pallas.1} parent=1 // pred_check
      _
    $region7: #{_grt_project_pallas.1} parent=1 // pred_check_branch
      %23 = sbr.rel (0) target = $region9
    $region8: #{_grt_project_pallas.1} parent=1 // pred_region
      %s25 = ssub.s32 512, 512
      %26 = vsyncadd [#allocation6], %s25
      %s27 = sshll.u32 [#allocation5], 4
      %s28 = int_to_ptr.vmem [resolvable:$true] %s27
      %33 = dma.hbm_to_vmem [thread:$0]  %s1, 512, %s28, [#allocation6], 128, 128, 8
    $region9: #{_grt_project_pallas.1} parent=1 // pred_fallthru
      _
    // Predicated region
    $region10: #{_grt_project_pallas.1} parent=1 // pred_check
      _
    $region11: #{_grt_project_pallas.1} parent=1 // pred_check_branch
      %35 = sbr.rel (0) target = $region13
    $region12: #{_grt_project_pallas.1} parent=1 // pred_region
      %36 = dma.done [#allocation3], 256
    $region13: #{_grt_project_pallas.1} parent=1 // pred_fallthru
      _
    // Predicated region
    $region14: #{_grt_project_pallas.1} parent=1 // pred_check
      _
    $region15: #{_grt_project_pallas.1} parent=1 // pred_check_branch
      %38 = sbr.rel (0) target = $region17
    $region16: #{_grt_project_pallas.1} parent=1 // pred_region
      %39 = dma.done [#allocation6], 512
    $region17: #{_grt_project_pallas.1} parent=1 // pred_fallthru
      _
    %v40 = vld [vmem:[#allocation2] sm:$0xff]
    %v41 = vld [vmem:[#allocation2 + $0x8] sm:$0xff]
    %v42 = vld [vmem:[#allocation5] sm:$0xff]
    %v43 = vld [vmem:[#allocation5 + $0x8] sm:$0xff]
    %v44 = vld [vmem:[#allocation5 + $0x10] sm:$0xff]
    %v45 = vld [vmem:[#allocation5 + $0x18] sm:$0xff]
    %vm46 = vcmask 261120
    %v48 = vsel %vm46, %v40, 0
    %v51 = vsel %vm46, %v41, 0
    %53 = vmatprep.subr.mxu0 0.0
    %54 = vmatpush1.msra.mxu0 %v42
    %55 = vmatprep.subr.mxu0 0.0
    %56 = vmatpush1.msra.mxu0 %v43
    %57 = vmatprep.subr.mxu0 0.0
    %58 = vmatpush1.msra.mxu0 %v44
    %59 = vmatprep.subr.mxu0 0.0
    %60 = vmatpush1.msra.mxu0 %v45
    %61 = vmatprep.subr.mxu0 0.0
    %62 = vmatpush1.msra.mxu0 0.0
    %63 = vmatprep.subr.mxu0 0.0
    %64 = vmatpush1.msra.mxu0 0.0
    %65 = vmatprep.subr.mxu0 0.0
    %66 = vmatpush1.msra.mxu0 0.0
    %67 = vmatprep.subr.mxu0 0.0
    %68 = vmatpush1.msra.mxu0 0.0
    %69 = vmatprep.subr.mxu0 0.0
    %70 = vmatpush1.msra.mxu0 0.0
    %71 = vmatprep.subr.mxu0 0.0
    %72 = vmatpush1.msra.mxu0 0.0
    %73 = vmatprep.subr.mxu0 0.0
    %74 = vmatpush1.msra.mxu0 0.0
    %75 = vmatprep.subr.mxu0 0.0
    %76 = vmatpush1.msra.mxu0 0.0
    %77 = vmatprep.subr.mxu0 0.0
    %78 = vmatpush1.msra.mxu0 0.0
    %79 = vmatprep.subr.mxu0 0.0
    %80 = vmatpush1.msra.mxu0 0.0
    %81 = vmatprep.subr.mxu0 0.0
    %82 = vmatpush1.msra.mxu0 0.0
    %83 = vmatprep.subr.mxu0 0.0
    %84 = vmatpush1.msra.mxu0 0.0
    %85 = vmatprep.subr.mxu0 0.0
    %86 = vmatpush1.msra.mxu0 0.0
    %87 = vmatprep.subr.mxu0 0.0
    %88 = vmatpush1.msra.mxu0 0.0
    %89 = vmatprep.subr.mxu0 0.0
    %90 = vmatpush1.msra.mxu0 0.0
    %91 = vmatprep.subr.mxu0 0.0
    %92 = vmatpush1.msra.mxu0 0.0
    %93 = vmatprep.subr.mxu0 0.0
    %94 = vmatpush1.msra.mxu0 0.0
    %95 = vmatprep.subr.mxu0 0.0
    %96 = vmatpush1.msra.mxu0 0.0
    %97 = vmatprep.subr.mxu0 0.0
    %98 = vmatpush1.msra.mxu0 0.0
    %99 = vmatprep.subr.mxu0 0.0
    %100 = vmatpush1.msra.mxu0 0.0
    %101 = vmatprep.subr.mxu0 0.0
    %102 = vmatpush1.msra.mxu0 0.0
    %103 = vmatprep.subr.mxu0 0.0
    %104 = vmatpush1.msra.mxu0 0.0
    %105 = vmatprep.subr.mxu0 0.0
    %106 = vmatpush1.msra.mxu0 0.0
    %107 = vmatprep.subr.mxu0 0.0
    %108 = vmatpush1.msra.mxu0 0.0
    %109 = vmatprep.subr.mxu0 0.0
    %110 = vmatpush1.msra.mxu0 0.0
    %111 = vmatprep.subr.mxu0 0.0
    %112 = vmatpush1.msra.mxu0 0.0
    %113 = vmatprep.subr.mxu0 0.0
    %114 = vmatpush1.msra.mxu0 0.0
    %115 = vmatprep.subr.mxu0 0.0
    %116 = vmatpush1.msra.mxu0 0.0
    %117 = vmatprep.mubr.f32.mxu0 0.0
    %118 = vmatmul.mubr.f32.gmra.mrb[0].mxu0 %v48
    %v119 = vpop.f32.mrb[0].mxu0
    %v120 = vadd.f32 0.0, %v119
    %v121 = vpop.f32.mrb[0].mxu0
    %122 = vmatprep.mubr.f32.mxu0 0.0
    %123 = vmatmul.mubr.f32.gmra.mrb[0].mxu0 %v51
    %v124 = vpop.f32.mrb[0].mxu0
    %v125 = vadd.f32 0.0, %v124
    %v126 = vpop.f32.mrb[0].mxu0
    %127 = vdwg.mxu0
    %128 = vst [vmem:[#allocation7] sm:$0xff] %v120
    %129 = vst [vmem:[#allocation7 + $0x8] sm:$0xff] %v125
    // Predicated region
    $region18: #{_grt_project_pallas.1} parent=1 // pred_check
      _
    $region19: #{_grt_project_pallas.1} parent=1 // pred_check_branch
      %131 = sbr.rel (0) target = $region21
    $region20: #{_grt_project_pallas.1} parent=1 // pred_region
      %s133 = ssub.s32 256, 256
      %134 = vsyncadd [#allocation4], %s133
      %s135 = sshll.u32 [#allocation7], 4
      %s136 = int_to_ptr.vmem [resolvable:$true] %s135
      %141 = dma.vmem_to_hbm [thread:$0]  %s136, 256, %s2, [#allocation4], 128, 128, 8
    $region21: #{_grt_project_pallas.1} parent=1 // pred_fallthru
      _
    // Predicated region
    $region22: #{_grt_project_pallas.1} parent=1 // pred_check
      _
    $region23: #{_grt_project_pallas.1} parent=1 // pred_check_branch
      %143 = sbr.rel (0) target = $region25
    $region24: #{_grt_project_pallas.1} parent=1 // pred_region
      %144 = dma.done [#allocation4], 256
    $region25: #{_grt_project_pallas.1} parent=1 // pred_fallthru
      _
    %145 = vsyncpa [#allocation3], 1
    %146 = vsyncpa [#allocation6], 1
    %147 = vsyncpa [#allocation4], 1

</llo_original>
